<compile_context>
chip_gen: v6e
topology: v6e:2x2x1
jax: 0.10.0
libtpu: 0.0.40
codegen_flags: <defaults>
</compile_context>

<pallas_src>
import functools

import jax
import jax.numpy as jnp
from jax.experimental import pallas as pl
from jax.experimental.pallas import tpu as pltpu

# ---- logical model config (small, consistent with the module) ---------------
BATCH = 2
INPUT_SIZE = 32          # stand-in for tfidf_train.shape[1]
HIDDEN_SIZE = 32
NUM_HIDDEN_LAYERS = 2
NUM_CLASSES = 2

# ---- TPU-friendly padded shapes ---------------------------------------------
LANE = 128               # last dim of every operand padded to a multiple of this
SUBLANE = 8              # f32 sublane height; batch padded up to this


def _round_up(n, m):
    return ((n + m - 1) // m) * m


B_PAD = max(SUBLANE, _round_up(BATCH, SUBLANE))
IN_PAD = _round_up(INPUT_SIZE, LANE)
HID_PAD = _round_up(HIDDEN_SIZE, LANE)
CLS_PAD = _round_up(NUM_CLASSES, LANE)


def _pad_to(a, shape):
    """Zero-pad `a` up to `shape` (trailing padding only)."""
    pads = [(0, t - s) for s, t in zip(a.shape, shape)]
    return jnp.pad(a, pads)


# ---- kernel ------------------------------------------------------------------
def mlp_kernel(x_ref, w_in_ref, b_in_ref, w_hid_ref, b_hid_ref,
               w_out_ref, b_out_ref, o_ref):
    # Entire padded network is VMEM-resident; fuse all layers into one body.
    h = jnp.dot(x_ref[...], w_in_ref[...],
                preferred_element_type=jnp.float32) + b_in_ref[...]
    # Hidden stack: ReLU -> Linear, static unroll (NUM_HIDDEN_LAYERS is small).
    for i in range(NUM_HIDDEN_LAYERS):
        h = jnp.maximum(h, 0.0)
        h = jnp.dot(h, w_hid_ref[i],
                    preferred_element_type=jnp.float32) + b_hid_ref[i]
    # Output projection; Dropout (eval mode) == identity.
    o = jnp.dot(h, w_out_ref[...],
                preferred_element_type=jnp.float32) + b_out_ref[...]
    o_ref[...] = o.astype(o_ref.dtype)


# ---- parameter padding (done ONCE, cached by the caller) ---------------------
def pad_params(params):
    """Zero-pad parameters to lane/sublane-aligned shapes.  Call once and reuse
    the returned padded pytree for every forward call."""
    w_in, b_in, w_hid, b_hid, w_out, b_out = params
    return (
        _pad_to(w_in, (IN_PAD, HID_PAD)),
        _pad_to(b_in, (1, HID_PAD)),
        _pad_to(w_hid, (NUM_HIDDEN_LAYERS, HID_PAD, HID_PAD)),
        _pad_to(b_hid, (NUM_HIDDEN_LAYERS, 1, HID_PAD)),
        _pad_to(w_out, (HID_PAD, CLS_PAD)),
        _pad_to(b_out, (1, CLS_PAD)),
    )


# ---- wrapper (jitted: input pad + kernel + output slice fuse into one dispatch)
@jax.jit
def mlp_forward(x, padded_params):
    w_in_p, b_in_p, w_hid_p, b_hid_p, w_out_p, b_out_p = padded_params
    B = x.shape[0]

    # Only the (tiny) activation is padded per call; params are pre-padded.
    xp = _pad_to(x, (B_PAD, IN_PAD))

    vmem_spec = pl.BlockSpec(memory_space=pltpu.MemorySpace.VMEM)

    out_p = pl.pallas_call(
        mlp_kernel,
        out_shape=jax.ShapeDtypeStruct((B_PAD, CLS_PAD), jnp.float32),
        in_specs=[vmem_spec] * 7,
        out_specs=vmem_spec,
    )(xp, w_in_p, b_in_p, w_hid_p, b_hid_p, w_out_p, b_out_p)

    # Slice the real rows/classes back out of the padded, lane-dense output.
    return out_p[:B, :NUM_CLASSES]


# ---- params & reference ------------------------------------------------------
def init_params(key):
    """Deterministic parameter init (uniform, Linear-style bounds)."""
    ks = jax.random.split(key, 6)

    def lin(k, fan_in, shape):
        bound = 1.0 / jnp.sqrt(fan_in)
        return jax.random.uniform(k, shape, jnp.float32, -bound, bound)

    w_in = lin(ks[0], INPUT_SIZE, (INPUT_SIZE, HIDDEN_SIZE))
    b_in = lin(ks[1], INPUT_SIZE, (1, HIDDEN_SIZE))
    w_hid = lin(ks[2], HIDDEN_SIZE,
                (NUM_HIDDEN_LAYERS, HIDDEN_SIZE, HIDDEN_SIZE))
    b_hid = lin(ks[3], HIDDEN_SIZE, (NUM_HIDDEN_LAYERS, 1, HIDDEN_SIZE))
    w_out = lin(ks[4], HIDDEN_SIZE, (HIDDEN_SIZE, NUM_CLASSES))
    b_out = lin(ks[5], HIDDEN_SIZE, (1, NUM_CLASSES))
    return (w_in, b_in, w_hid, b_hid, w_out, b_out)


def reference_forward(x, params):
    """Pure-JAX reference with identical semantics (eval-mode dropout = id)."""
    w_in, b_in, w_hid, b_hid, w_out, b_out = params
    h = x @ w_in + b_in
    for i in range(NUM_HIDDEN_LAYERS):
        h = jnp.maximum(h, 0.0)
        h = h @ w_hid[i] + b_hid[i]
    return h @ w_out + b_out


if __name__ == "__main__":
    key = jax.random.PRNGKey(0)
    k_x, k_p = jax.random.split(key)
    x = jax.random.normal(k_x, (BATCH, INPUT_SIZE), jnp.float32)
    params = init_params(k_p)

    # Pad once; reuse the padded params for every forward call.
    padded_params = jax.tree_util.tree_map(jax.block_until_ready,
                                           pad_params(params))

    out = mlp_forward(x, padded_params)
    out = jax.block_until_ready(out)

    ref = reference_forward(x, params)
    assert out.shape == (BATCH, NUM_CLASSES)
    assert jnp.allclose(out, ref, atol=1e-5, rtol=1e-5)
    print("KERNEL_OK")
</pallas_src>

<mosaic_0001>
module attributes {stable_mosaic.version = 11 : i64} {
  func.func @mlp_kernel(%arg0: memref<8x128xf32, #tpu.memory_space<vmem>>, %arg1: memref<128x128xf32, #tpu.memory_space<vmem>>, %arg2: memref<1x128xf32, #tpu.memory_space<vmem>>, %arg3: memref<2x128x128xf32, #tpu.memory_space<vmem>>, %arg4: memref<2x1x128xf32, #tpu.memory_space<vmem>>, %arg5: memref<128x128xf32, #tpu.memory_space<vmem>>, %arg6: memref<1x128xf32, #tpu.memory_space<vmem>>, %arg7: memref<8x128xf32, #tpu.memory_space<vmem>>) attributes {dimension_semantics = [], scalar_prefetch = 0 : i64, scratch_operands = 0 : i64, tpu.core_type = #tpu.core_type<tc>} {
    %c0 = arith.constant 0 : index
    %c0_0 = arith.constant 0 : index
    %0 = vector.load %arg0[%c0, %c0_0] : memref<8x128xf32, #tpu.memory_space<vmem>>, vector<8x128xf32>
    %c0_1 = arith.constant 0 : index
    %c0_2 = arith.constant 0 : index
    %1 = vector.load %arg1[%c0_1, %c0_2] : memref<128x128xf32, #tpu.memory_space<vmem>>, vector<128x128xf32>
    %cst = arith.constant dense<0.000000e+00> : vector<8x128xf32>
    %2 = tpu.matmul %0, %1, %cst {dimension_numbers = #tpu.dot_dimension_numbers<[1], [0], [0], [1], [0, 0, 1, 1], [], []>} : vector<8x128xf32>, vector<128x128xf32>, vector<8x128xf32> -> vector<8x128xf32>
    %c0_3 = arith.constant 0 : index
    %c0_4 = arith.constant 0 : index
    %3 = vector.load %arg2[%c0_3, %c0_4] : memref<1x128xf32, #tpu.memory_space<vmem>>, vector<1x128xf32>
    %4 = vector.broadcast %3 : vector<1x128xf32> to vector<8x128xf32>
    %5 = arith.addf %2, %4 : vector<8x128xf32>
    %cst_5 = arith.constant 0.000000e+00 : f32
    %6 = vector.broadcast %cst_5 : f32 to vector<8x128xf32>
    %7 = arith.maximumf %5, %6 : vector<8x128xf32>
    %c0_6 = arith.constant 0 : index
    %c0_7 = arith.constant 0 : index
    %c0_8 = arith.constant 0 : index
    %8 = vector.load %arg3[%c0_6, %c0_7, %c0_8] : memref<2x128x128xf32, #tpu.memory_space<vmem>>, vector<1x128x128xf32>
    %9 = vector.shape_cast %8 : vector<1x128x128xf32> to vector<128x128xf32>
    %cst_9 = arith.constant dense<0.000000e+00> : vector<8x128xf32>
    %10 = tpu.matmul %7, %9, %cst_9 {dimension_numbers = #tpu.dot_dimension_numbers<[1], [0], [0], [1], [0, 0, 1, 1], [], []>} : vector<8x128xf32>, vector<128x128xf32>, vector<8x128xf32> -> vector<8x128xf32>
    %c0_10 = arith.constant 0 : index
    %c0_11 = arith.constant 0 : index
    %c0_12 = arith.constant 0 : index
    %11 = vector.load %arg4[%c0_10, %c0_11, %c0_12] : memref<2x1x128xf32, #tpu.memory_space<vmem>>, vector<1x1x128xf32>
    %12 = vector.shape_cast %11 : vector<1x1x128xf32> to vector<1x128xf32>
    %13 = vector.broadcast %12 : vector<1x128xf32> to vector<8x128xf32>
    %14 = arith.addf %10, %13 : vector<8x128xf32>
    %cst_13 = arith.constant 0.000000e+00 : f32
    %15 = vector.broadcast %cst_13 : f32 to vector<8x128xf32>
    %16 = arith.maximumf %14, %15 : vector<8x128xf32>
    %c1 = arith.constant 1 : index
    %c0_14 = arith.constant 0 : index
    %c0_15 = arith.constant 0 : index
    %17 = vector.load %arg3[%c1, %c0_14, %c0_15] : memref<2x128x128xf32, #tpu.memory_space<vmem>>, vector<1x128x128xf32>
    %18 = vector.shape_cast %17 : vector<1x128x128xf32> to vector<128x128xf32>
    %cst_16 = arith.constant dense<0.000000e+00> : vector<8x128xf32>
    %19 = tpu.matmul %16, %18, %cst_16 {dimension_numbers = #tpu.dot_dimension_numbers<[1], [0], [0], [1], [0, 0, 1, 1], [], []>} : vector<8x128xf32>, vector<128x128xf32>, vector<8x128xf32> -> vector<8x128xf32>
    %c1_17 = arith.constant 1 : index
    %c0_18 = arith.constant 0 : index
    %c0_19 = arith.constant 0 : index
    %20 = vector.load %arg4[%c1_17, %c0_18, %c0_19] : memref<2x1x128xf32, #tpu.memory_space<vmem>>, vector<1x1x128xf32>
    %21 = vector.shape_cast %20 : vector<1x1x128xf32> to vector<1x128xf32>
    %22 = vector.broadcast %21 : vector<1x128xf32> to vector<8x128xf32>
    %23 = arith.addf %19, %22 : vector<8x128xf32>
    %c0_20 = arith.constant 0 : index
    %c0_21 = arith.constant 0 : index
    %24 = vector.load %arg5[%c0_20, %c0_21] : memref<128x128xf32, #tpu.memory_space<vmem>>, vector<128x128xf32>
    %cst_22 = arith.constant dense<0.000000e+00> : vector<8x128xf32>
    %25 = tpu.matmul %23, %24, %cst_22 {dimension_numbers = #tpu.dot_dimension_numbers<[1], [0], [0], [1], [0, 0, 1, 1], [], []>} : vector<8x128xf32>, vector<128x128xf32>, vector<8x128xf32> -> vector<8x128xf32>
    %c0_23 = arith.constant 0 : index
    %c0_24 = arith.constant 0 : index
    %26 = vector.load %arg6[%c0_23, %c0_24] : memref<1x128xf32, #tpu.memory_space<vmem>>, vector<1x128xf32>
    %27 = vector.broadcast %26 : vector<1x128xf32> to vector<8x128xf32>
    %28 = arith.addf %25, %27 : vector<8x128xf32>
    %c0_25 = arith.constant 0 : index
    %c0_26 = arith.constant 0 : index
    %29 = vector.load %arg7[%c0_25, %c0_26] : memref<8x128xf32, #tpu.memory_space<vmem>>, vector<8x128xf32>
    tpu.vector_store %arg7[%c0_25, %c0_26], %28 {strides = array<i32>} : memref<8x128xf32, #tpu.memory_space<vmem>>, vector<8x128xf32>,
    return
  }
}

</mosaic_0001>

<llo_original>
// kernel: mlp_forward.1
$region0: #{mlp_forward.1}
  #allocation0 [shape = 'u32[]', space=smem, size = 0x4, offset = 0x4, fixed_abs, tag = 'smem constant byte address 0x4 - core index']
  #allocation1 [shape = 'u32[144,128]{1,0:T(1,128)}', space=vmem, size = 0x12000, scoped, tag = 'internal scratch']
  %s0 = inlined_call_operand.vmem [shape: f32[8,128], index: 0, kind: input, shape index: {}]
  %s1 = inlined_call_operand.hbm [shape: f32[128,128], index: 1, kind: input, shape index: {}]
  %s2 = inlined_call_operand.vmem [shape: f32[1,128], index: 2, kind: input, shape index: {}]
  %s3 = inlined_call_operand.hbm [shape: f32[2,128,128], index: 3, kind: input, shape index: {}]
  %s4 = inlined_call_operand.vmem [shape: f32[2,1,128], index: 4, kind: input, shape index: {}]
  %s5 = inlined_call_operand.hbm [shape: f32[128,128], index: 5, kind: input, shape index: {}]
  %s6 = inlined_call_operand.vmem [shape: f32[1,128], index: 6, kind: input, shape index: {}]
  %s7 = inlined_call_operand.vmem [shape: f32[8,128], index: 7, kind: output, shape index: {}]
  %s8 = sld [smem:[#allocation0]]
  $region50: #{mlp_forward.1} parent=0
    _
  %s10 = ssub.s32 1, %s8
  %s11 = scalar_select 0, %s10, %s8
  $region1: #{mlp_forward.1} parent=0
    #allocation2 [shape = 'u8[65536]{0}', space=vmem, size = 0x10000, scoped, tag = 'input window, operand 1, single buffered']
    #allocation3 [shape = 's32[1]{0}', space=sflag, size = 0x4, scoped, tag = 'scoped memory for mlp_forward.1']
    #allocation4 [shape = 'u8[131072]{0}', space=vmem, size = 0x20000, scoped, tag = 'input window, operand 3, single buffered']
    #allocation5 [shape = 's32[1]{0}', space=sflag, size = 0x4, scoped, tag = 'scoped memory for mlp_forward.1']
    #allocation6 [shape = 'u8[65536]{0}', space=vmem, size = 0x10000, scoped, tag = 'input window, operand 5, single buffered']
    %12 = vsyncpa [#allocation3], 0
    %13 = vsyncpa [#allocation5], 0
    // Predicated region
    $region2: #{mlp_forward.1} parent=1 // pred_check
      _
    $region3: #{mlp_forward.1} parent=1 // pred_check_branch
      %15 = sbr.rel (0) target = $region5
    $region4: #{mlp_forward.1} parent=1 // pred_region
      _
    $region5: #{mlp_forward.1} parent=1 // pred_fallthru
      _
    // Predicated region
    $region6: #{mlp_forward.1} parent=1 // pred_check
      _
    $region7: #{mlp_forward.1} parent=1 // pred_check_branch
      %17 = sbr.rel (0) target = $region9
    $region8: #{mlp_forward.1} parent=1 // pred_region
      %s19 = ssub.s32 2048, 2048
      %20 = vsyncadd [#allocation3], %s19
      %s21 = sshll.u32 [#allocation2], 4
      %s22 = int_to_ptr.vmem [resolvable:$true] %s21
      %27 = dma.hbm_to_vmem [thread:$0]  %s1, 2048, %s22, [#allocation3], 128, 128, 8
    $region9: #{mlp_forward.1} parent=1 // pred_fallthru
      _
    // Predicated region
    $region10: #{mlp_forward.1} parent=1 // pred_check
      _
    $region11: #{mlp_forward.1} parent=1 // pred_check_branch
      %29 = sbr.rel (0) target = $region13
    $region12: #{mlp_forward.1} parent=1 // pred_region
      _
    $region13: #{mlp_forward.1} parent=1 // pred_fallthru
      _
    // Predicated region
    $region14: #{mlp_forward.1} parent=1 // pred_check
      _
    $region15: #{mlp_forward.1} parent=1 // pred_check_branch
      %31 = sbr.rel (0) target = $region17
    $region16: #{mlp_forward.1} parent=1 // pred_region
      %s33 = ssub.s32 4096, 4096
      %34 = vsyncadd [#allocation5], %s33
      %s35 = sshll.u32 [#allocation4], 4
      %s36 = int_to_ptr.vmem [resolvable:$true] %s35
      %41 = dma.hbm_to_vmem [thread:$0]  %s3, 4096, %s36, [#allocation5], 128, 128, 8
    $region17: #{mlp_forward.1} parent=1 // pred_fallthru
      _
    // Predicated region
    $region18: #{mlp_forward.1} parent=1 // pred_check
      _
    $region19: #{mlp_forward.1} parent=1 // pred_check_branch
      %43 = sbr.rel (0) target = $region21
    $region20: #{mlp_forward.1} parent=1 // pred_region
      _
    $region21: #{mlp_forward.1} parent=1 // pred_fallthru
      _
    // Predicated region
    $region22: #{mlp_forward.1} parent=1 // pred_check
      _
    $region23: #{mlp_forward.1} parent=1 // pred_check_branch
      %45 = sbr.rel (0) target = $region25
    $region24: #{mlp_forward.1} parent=1 // pred_region
      %s47 = ssub.s32 2048, 2048
      %48 = vsyncadd [#allocation5], %s47
      %s49 = sshll.u32 [#allocation6], 4
      %s50 = int_to_ptr.vmem [resolvable:$true] %s49
      %55 = dma.hbm_to_vmem [thread:$0]  %s5, 2048, %s50, [#allocation5], 128, 128, 8
    $region25: #{mlp_forward.1} parent=1 // pred_fallthru
      _
    // Predicated region
    $region26: #{mlp_forward.1} parent=1 // pred_check
      _
    $region27: #{mlp_forward.1} parent=1 // pred_check_branch
      %57 = sbr.rel (0) target = $region29
    $region28: #{mlp_forward.1} parent=1 // pred_region
      _
    $region29: #{mlp_forward.1} parent=1 // pred_fallthru
      _
    // Predicated region
    $region30: #{mlp_forward.1} parent=1 // pred_check
      _
    $region31: #{mlp_forward.1} parent=1 // pred_check_branch
      %59 = sbr.rel (0) target = $region33
    $region32: #{mlp_forward.1} parent=1 // pred_region
      %60 = dma.done [#allocation3], 2048
    $region33: #{mlp_forward.1} parent=1 // pred_fallthru
      _
    // Predicated region
    $region34: #{mlp_forward.1} parent=1 // pred_check
      _
    $region35: #{mlp_forward.1} parent=1 // pred_check_branch
      %62 = sbr.rel (0) target = $region37
    $region36: #{mlp_forward.1} parent=1 // pred_region
      %63 = dma.done [#allocation5], 4096
    $region37: #{mlp_forward.1} parent=1 // pred_fallthru
      _
    // Predicated region
    $region38: #{mlp_forward.1} parent=1 // pred_check
      _
    $region39: #{mlp_forward.1} parent=1 // pred_check_branch
      %65 = sbr.rel (0) target = $region41
    $region40: #{mlp_forward.1} parent=1 // pred_region
      %66 = dma.done [#allocation5], 2048
    $region41: #{mlp_forward.1} parent=1 // pred_fallthru
      _
    %v67 = vld [vmem:[%s0] sm:$0xff]
    %v68 = vld [vmem:[#allocation2] sm:$0xff]
    %v69 = vld [vmem:[#allocation2 + $0x8] sm:$0xff]
    %v70 = vld [vmem:[#allocation2 + $0x10] sm:$0xff]
    %v71 = vld [vmem:[#allocation2 + $0x18] sm:$0xff]
    %v72 = vld [vmem:[#allocation2 + $0x20] sm:$0xff]
    %v73 = vld [vmem:[#allocation2 + $0x28] sm:$0xff]
    %v74 = vld [vmem:[#allocation2 + $0x30] sm:$0xff]
    %v75 = vld [vmem:[#allocation2 + $0x38] sm:$0xff]
    %v76 = vld [vmem:[#allocation2 + $0x40] sm:$0xff]
    %v77 = vld [vmem:[#allocation2 + $0x48] sm:$0xff]
    %v78 = vld [vmem:[#allocation2 + $0x50] sm:$0xff]
    %v79 = vld [vmem:[#allocation2 + $0x58] sm:$0xff]
    %v80 = vld [vmem:[#allocation2 + $0x60] sm:$0xff]
    %v81 = vld [vmem:[#allocation2 + $0x68] sm:$0xff]
    %v82 = vld [vmem:[#allocation2 + $0x70] sm:$0xff]
    %v83 = vld [vmem:[#allocation2 + $0x78] sm:$0xff]
    %v84 = vld [vmem:[%s2] sm:$0x1]
    %v86 = vlaneseq
    %v87 = vshrl.u32 %v86, 7
    %v88 = vsub.s32 0, %v87
    %v89 = vrot.slane %v84, %v88
    %91 = vmatprep.subr.mxu0 0.0
    %92 = vmatpush1.msra.mxu0 %v83
    %93 = vmatprep.subr.mxu0 0.0
    %94 = vmatpush1.msra.mxu0 %v82
    %95 = vmatprep.subr.mxu0 0.0
    %96 = vmatpush1.msra.mxu0 %v81
    %97 = vmatprep.subr.mxu0 0.0
    %98 = vmatpush1.msra.mxu0 %v80
    %99 = vmatprep.subr.mxu0 0.0
    %100 = vmatpush1.msra.mxu0 %v79
    %101 = vmatprep.subr.mxu0 0.0
    %102 = vmatpush1.msra.mxu0 %v78
    %103 = vmatprep.subr.mxu0 0.0
    %104 = vmatpush1.msra.mxu0 %v77
    %105 = vmatprep.subr.mxu0 0.0
    %106 = vmatpush1.msra.mxu0 %v76
    %107 = vmatprep.subr.mxu0 0.0
    %108 = vmatpush1.msra.mxu0 %v75
    %109 = vmatprep.subr.mxu0 0.0
    %110 = vmatpush1.msra.mxu0 %v74
    %111 = vmatprep.subr.mxu0 0.0
    %112 = vmatpush1.msra.mxu0 %v73
    %113 = vmatprep.subr.mxu0 0.0
    %114 = vmatpush1.msra.mxu0 %v72
    %115 = vmatprep.subr.mxu0 0.0
    %116 = vmatpush1.msra.mxu0 %v71
    %117 = vmatprep.subr.mxu0 0.0
    %118 = vmatpush1.msra.mxu0 %v70
    %119 = vmatprep.subr.mxu0 0.0
    %120 = vmatpush1.msra.mxu0 %v69
    %121 = vmatprep.subr.mxu0 0.0
    %122 = vmatpush1.msra.mxu0 %v68
    %123 = vmatprep.subr.mxu0 0.0
    %124 = vmatpush2.msra.mxu0 0.0
    %125 = vmatprep.subr.mxu0 0.0
    %126 = vmatpush2.msra.mxu0 0.0
    %127 = vmatprep.subr.mxu0 0.0
    %128 = vmatpush2.msra.mxu0 0.0
    %129 = vmatprep.subr.mxu0 0.0
    %130 = vmatpush2.msra.mxu0 0.0
    %131 = vmatprep.subr.mxu0 0.0
    %132 = vmatpush2.msra.mxu0 0.0
    %133 = vmatprep.subr.mxu0 0.0
    %134 = vmatpush2.msra.mxu0 0.0
    %135 = vmatprep.subr.mxu0 0.0
    %136 = vmatpush2.msra.mxu0 0.0
    %137 = vmatprep.subr.mxu0 0.0
    %138 = vmatpush2.msra.mxu0 0.0
    %139 = vmatprep.subr.mxu0 0.0
    %140 = vmatpush2.msra.mxu0 0.0
    %141 = vmatprep.subr.mxu0 0.0
    %142 = vmatpush2.msra.mxu0 0.0
    %143 = vmatprep.subr.mxu0 0.0
    %144 = vmatpush2.msra.mxu0 0.0
    %145 = vmatprep.subr.mxu0 0.0
    %146 = vmatpush2.msra.mxu0 0.0
    %147 = vmatprep.subr.mxu0 0.0
    %148 = vmatpush2.msra.mxu0 0.0
    %149 = vmatprep.subr.mxu0 0.0
    %150 = vmatpush2.msra.mxu0 0.0
    %151 = vmatprep.subr.mxu0 0.0
    %152 = vmatpush2.msra.mxu0 0.0
    %153 = vmatprep.subr.mxu0 0.0
    %154 = vmatpush2.msra.mxu0 0.0
    %155 = vmatprep.mubr.f32.mxu0 0.0
    %156 = vmatmul.mubr.f32.gmra.mxu0 %v67
    %v157 = vpop.f32.mrf.mxu0
    %v158 = vadd.f32 %v89, %v157
    %v159 = vpop.f32.mrf.mxu0
    %160 = vdwg.mxu0
    %v161 = vmax.f32 %v158, 0.0
    %v162 = vld [vmem:[#allocation4] sm:$0xff]
    %v163 = vld [vmem:[#allocation4 + $0x8] sm:$0xff]
    %v164 = vld [vmem:[#allocation4 + $0x10] sm:$0xff]
    %v165 = vld [vmem:[#allocation4 + $0x18] sm:$0xff]
    %v166 = vld [vmem:[#allocation4 + $0x20] sm:$0xff]
    %v167 = vld [vmem:[#allocation4 + $0x28] sm:$0xff]
    %v168 = vld [vmem:[#allocation4 + $0x30] sm:$0xff]
    %v169 = vld [vmem:[#allocation4 + $0x38] sm:$0xff]
    %v170 = vld [vmem:[#allocation4 + $0x40] sm:$0xff]
    %v171 = vld [vmem:[#allocation4 + $0x48] sm:$0xff]
    %v172 = vld [vmem:[#allocation4 + $0x50] sm:$0xff]
    %v173 = vld [vmem:[#allocation4 + $0x58] sm:$0xff]
    %v174 = vld [vmem:[#allocation4 + $0x60] sm:$0xff]
    %v175 = vld [vmem:[#allocation4 + $0x68] sm:$0xff]
    %v176 = vld [vmem:[#allocation4 + $0x70] sm:$0xff]
    %v177 = vld [vmem:[#allocation4 + $0x78] sm:$0xff]
    %v178 = vld [vmem:[%s4] sm:$0x1]
    %v180 = vlaneseq
    %v181 = vshrl.u32 %v180, 7
    %v182 = vsub.s32 0, %v181
    %v183 = vrot.slane %v178, %v182
    %185 = vmatprep.subr.mxu0 0.0
    %186 = vmatpush1.msra.mxu0 %v177
    %187 = vmatprep.subr.mxu0 0.0
    %188 = vmatpush1.msra.mxu0 %v176
    %189 = vmatprep.subr.mxu0 0.0
    %190 = vmatpush1.msra.mxu0 %v175
    %191 = vmatprep.subr.mxu0 0.0
    %192 = vmatpush1.msra.mxu0 %v174
    %193 = vmatprep.subr.mxu0 0.0
    %194 = vmatpush1.msra.mxu0 %v173
    %195 = vmatprep.subr.mxu0 0.0
    %196 = vmatpush1.msra.mxu0 %v172
    %197 = vmatprep.subr.mxu0 0.0
    %198 = vmatpush1.msra.mxu0 %v171
    %199 = vmatprep.subr.mxu0 0.0
    %200 = vmatpush1.msra.mxu0 %v170
    %201 = vmatprep.subr.mxu0 0.0
    %202 = vmatpush1.msra.mxu0 %v169
    %203 = vmatprep.subr.mxu0 0.0
    %204 = vmatpush1.msra.mxu0 %v168
    %205 = vmatprep.subr.mxu0 0.0
    %206 = vmatpush1.msra.mxu0 %v167
    %207 = vmatprep.subr.mxu0 0.0
    %208 = vmatpush1.msra.mxu0 %v166
    %209 = vmatprep.subr.mxu0 0.0
    %210 = vmatpush1.msra.mxu0 %v165
    %211 = vmatprep.subr.mxu0 0.0
    %212 = vmatpush1.msra.mxu0 %v164
    %213 = vmatprep.subr.mxu0 0.0
    %214 = vmatpush1.msra.mxu0 %v163
    %215 = vmatprep.subr.mxu0 0.0
    %216 = vmatpush1.msra.mxu0 %v162
    %217 = vmatprep.subr.mxu0 0.0
    %218 = vmatpush2.msra.mxu0 0.0
    %219 = vmatprep.subr.mxu0 0.0
    %220 = vmatpush2.msra.mxu0 0.0
    %221 = vmatprep.subr.mxu0 0.0
    %222 = vmatpush2.msra.mxu0 0.0
    %223 = vmatprep.subr.mxu0 0.0
    %224 = vmatpush2.msra.mxu0 0.0
    %225 = vmatprep.subr.mxu0 0.0
    %226 = vmatpush2.msra.mxu0 0.0
    %227 = vmatprep.subr.mxu0 0.0
    %228 = vmatpush2.msra.mxu0 0.0
    %229 = vmatprep.subr.mxu0 0.0
    %230 = vmatpush2.msra.mxu0 0.0
    %231 = vmatprep.subr.mxu0 0.0
    %232 = vmatpush2.msra.mxu0 0.0
    %233 = vmatprep.subr.mxu0 0.0
    %234 = vmatpush2.msra.mxu0 0.0
    %235 = vmatprep.subr.mxu0 0.0
    %236 = vmatpush2.msra.mxu0 0.0
    %237 = vmatprep.subr.mxu0 0.0
    %238 = vmatpush2.msra.mxu0 0.0
    %239 = vmatprep.subr.mxu0 0.0
    %240 = vmatpush2.msra.mxu0 0.0
    %241 = vmatprep.subr.mxu0 0.0
    %242 = vmatpush2.msra.mxu0 0.0
    %243 = vmatprep.subr.mxu0 0.0
    %244 = vmatpush2.msra.mxu0 0.0
    %245 = vmatprep.subr.mxu0 0.0
    %246 = vmatpush2.msra.mxu0 0.0
    %247 = vmatprep.subr.mxu0 0.0
    %248 = vmatpush2.msra.mxu0 0.0
    %249 = vmatprep.mubr.f32.mxu0 0.0
    %250 = vmatmul.mubr.f32.gmra.mxu0 %v161
    %v251 = vpop.f32.mrf.mxu0
    %v252 = vadd.f32 %v183, %v251
    %v253 = vpop.f32.mrf.mxu0
    %254 = vdwg.mxu0
    %v255 = vmax.f32 %v252, 0.0
    %s256 = scalar_lea.vmem [#allocation4], 128
    %v257 = vld [vmem:[%s256] sm:$0xff]
    %v258 = vld [vmem:[%s256 + $0x8] sm:$0xff]
    %v259 = vld [vmem:[%s256 + $0x10] sm:$0xff]
    %v260 = vld [vmem:[%s256 + $0x18] sm:$0xff]
    %v261 = vld [vmem:[%s256 + $0x20] sm:$0xff]
    %v262 = vld [vmem:[%s256 + $0x28] sm:$0xff]
    %v263 = vld [vmem:[%s256 + $0x30] sm:$0xff]
    %v264 = vld [vmem:[%s256 + $0x38] sm:$0xff]
    %v265 = vld [vmem:[%s256 + $0x40] sm:$0xff]
    %v266 = vld [vmem:[%s256 + $0x48] sm:$0xff]
    %v267 = vld [vmem:[%s256 + $0x50] sm:$0xff]
    %v268 = vld [vmem:[%s256 + $0x58] sm:$0xff]
    %v269 = vld [vmem:[%s256 + $0x60] sm:$0xff]
    %v270 = vld [vmem:[%s256 + $0x68] sm:$0xff]
    %v271 = vld [vmem:[%s256 + $0x70] sm:$0xff]
    %v272 = vld [vmem:[%s256 + $0x78] sm:$0xff]
    %s273 = scalar_lea.vmem %s4, 1
    %v274 = vld [vmem:[%s273] sm:$0x1]
    %v276 = vlaneseq
    %v277 = vshrl.u32 %v276, 7
    %v278 = vsub.s32 0, %v277
    %v279 = vrot.slane %v274, %v278
    %281 = vmatprep.subr.mxu0 0.0
    %282 = vmatpush1.msra.mxu0 %v272
    %283 = vmatprep.subr.mxu0 0.0
    %284 = vmatpush1.msra.mxu0 %v271
    %285 = vmatprep.subr.mxu0 0.0
    %286 = vmatpush1.msra.mxu0 %v270
    %287 = vmatprep.subr.mxu0 0.0
    %288 = vmatpush1.msra.mxu0 %v269
    %289 = vmatprep.subr.mxu0 0.0
    %290 = vmatpush1.msra.mxu0 %v268
    %291 = vmatprep.subr.mxu0 0.0
    %292 = vmatpush1.msra.mxu0 %v267
    %293 = vmatprep.subr.mxu0 0.0
    %294 = vmatpush1.msra.mxu0 %v266
    %295 = vmatprep.subr.mxu0 0.0
    %296 = vmatpush1.msra.mxu0 %v265
    %297 = vmatprep.subr.mxu0 0.0
    %298 = vmatpush1.msra.mxu0 %v264
    %299 = vmatprep.subr.mxu0 0.0
    %300 = vmatpush1.msra.mxu0 %v263
    %301 = vmatprep.subr.mxu0 0.0
    %302 = vmatpush1.msra.mxu0 %v262
    %303 = vmatprep.subr.mxu0 0.0
    %304 = vmatpush1.msra.mxu0 %v261
    %305 = vmatprep.subr.mxu0 0.0
    %306 = vmatpush1.msra.mxu0 %v260
    %307 = vmatprep.subr.mxu0 0.0
    %308 = vmatpush1.msra.mxu0 %v259
    %309 = vmatprep.subr.mxu0 0.0
    %310 = vmatpush1.msra.mxu0 %v258
    %311 = vmatprep.subr.mxu0 0.0
    %312 = vmatpush1.msra.mxu0 %v257
    %313 = vmatprep.subr.mxu0 0.0
    %314 = vmatpush2.msra.mxu0 0.0
    %315 = vmatprep.subr.mxu0 0.0
    %316 = vmatpush2.msra.mxu0 0.0
    %317 = vmatprep.subr.mxu0 0.0
    %318 = vmatpush2.msra.mxu0 0.0
    %319 = vmatprep.subr.mxu0 0.0
    %320 = vmatpush2.msra.mxu0 0.0
    %321 = vmatprep.subr.mxu0 0.0
    %322 = vmatpush2.msra.mxu0 0.0
    %323 = vmatprep.subr.mxu0 0.0
    %324 = vmatpush2.msra.mxu0 0.0
    %325 = vmatprep.subr.mxu0 0.0
    %326 = vmatpush2.msra.mxu0 0.0
    %327 = vmatprep.subr.mxu0 0.0
    %328 = vmatpush2.msra.mxu0 0.0
    %329 = vmatprep.subr.mxu0 0.0
    %330 = vmatpush2.msra.mxu0 0.0
    %331 = vmatprep.subr.mxu0 0.0
    %332 = vmatpush2.msra.mxu0 0.0
    %333 = vmatprep.subr.mxu0 0.0
    %334 = vmatpush2.msra.mxu0 0.0
    %335 = vmatprep.subr.mxu0 0.0
    %336 = vmatpush2.msra.mxu0 0.0
    %337 = vmatprep.subr.mxu0 0.0
    %338 = vmatpush2.msra.mxu0 0.0
    %339 = vmatprep.subr.mxu0 0.0
    %340 = vmatpush2.msra.mxu0 0.0
    %341 = vmatprep.subr.mxu0 0.0
    %342 = vmatpush2.msra.mxu0 0.0
    %343 = vmatprep.subr.mxu0 0.0
    %344 = vmatpush2.msra.mxu0 0.0
    %345 = vmatprep.mubr.f32.mxu0 0.0
    %346 = vmatmul.mubr.f32.gmra.mxu0 %v255
    %v347 = vpop.f32.mrf.mxu0
    %v348 = vadd.f32 %v279, %v347
    %v349 = vpop.f32.mrf.mxu0
    %350 = vdwg.mxu0
    %v351 = vld [vmem:[#allocation6] sm:$0xff]
    %v352 = vld [vmem:[#allocation6 + $0x8] sm:$0xff]
    %v353 = vld [vmem:[#allocation6 + $0x10] sm:$0xff]
    %v354 = vld [vmem:[#allocation6 + $0x18] sm:$0xff]
    %v355 = vld [vmem:[#allocation6 + $0x20] sm:$0xff]
    %v356 = vld [vmem:[#allocation6 + $0x28] sm:$0xff]
    %v357 = vld [vmem:[#allocation6 + $0x30] sm:$0xff]
    %v358 = vld [vmem:[#allocation6 + $0x38] sm:$0xff]
    %v359 = vld [vmem:[#allocation6 + $0x40] sm:$0xff]
    %v360 = vld [vmem:[#allocation6 + $0x48] sm:$0xff]
    %v361 = vld [vmem:[#allocation6 + $0x50] sm:$0xff]
    %v362 = vld [vmem:[#allocation6 + $0x58] sm:$0xff]
    %v363 = vld [vmem:[#allocation6 + $0x60] sm:$0xff]
    %v364 = vld [vmem:[#allocation6 + $0x68] sm:$0xff]
    %v365 = vld [vmem:[#allocation6 + $0x70] sm:$0xff]
    %v366 = vld [vmem:[#allocation6 + $0x78] sm:$0xff]
    %v367 = vld [vmem:[%s6] sm:$0x1]
    %v369 = vlaneseq
    %v370 = vshrl.u32 %v369, 7
    %v371 = vsub.s32 0, %v370
    %v372 = vrot.slane %v367, %v371
    %374 = vmatprep.subr.mxu0 0.0
    %375 = vmatpush1.msra.mxu0 %v366
    %376 = vmatprep.subr.mxu0 0.0
    %377 = vmatpush1.msra.mxu0 %v365
    %378 = vmatprep.subr.mxu0 0.0
    %379 = vmatpush1.msra.mxu0 %v364
    %380 = vmatprep.subr.mxu0 0.0
    %381 = vmatpush1.msra.mxu0 %v363
    %382 = vmatprep.subr.mxu0 0.0
    %383 = vmatpush1.msra.mxu0 %v362
    %384 = vmatprep.subr.mxu0 0.0
    %385 = vmatpush1.msra.mxu0 %v361
    %386 = vmatprep.subr.mxu0 0.0
    %387 = vmatpush1.msra.mxu0 %v360
    %388 = vmatprep.subr.mxu0 0.0
    %389 = vmatpush1.msra.mxu0 %v359
    %390 = vmatprep.subr.mxu0 0.0
    %391 = vmatpush1.msra.mxu0 %v358
    %392 = vmatprep.subr.mxu0 0.0
    %393 = vmatpush1.msra.mxu0 %v357
    %394 = vmatprep.subr.mxu0 0.0
    %395 = vmatpush1.msra.mxu0 %v356
    %396 = vmatprep.subr.mxu0 0.0
    %397 = vmatpush1.msra.mxu0 %v355
    %398 = vmatprep.subr.mxu0 0.0
    %399 = vmatpush1.msra.mxu0 %v354
    %400 = vmatprep.subr.mxu0 0.0
    %401 = vmatpush1.msra.mxu0 %v353
    %402 = vmatprep.subr.mxu0 0.0
    %403 = vmatpush1.msra.mxu0 %v352
    %404 = vmatprep.subr.mxu0 0.0
    %405 = vmatpush1.msra.mxu0 %v351
    %406 = vmatprep.subr.mxu0 0.0
    %407 = vmatpush2.msra.mxu0 0.0
    %408 = vmatprep.subr.mxu0 0.0
    %409 = vmatpush2.msra.mxu0 0.0
    %410 = vmatprep.subr.mxu0 0.0
    %411 = vmatpush2.msra.mxu0 0.0
    %412 = vmatprep.subr.mxu0 0.0
    %413 = vmatpush2.msra.mxu0 0.0
    %414 = vmatprep.subr.mxu0 0.0
    %415 = vmatpush2.msra.mxu0 0.0
    %416 = vmatprep.subr.mxu0 0.0
    %417 = vmatpush2.msra.mxu0 0.0
    %418 = vmatprep.subr.mxu0 0.0
    %419 = vmatpush2.msra.mxu0 0.0
    %420 = vmatprep.subr.mxu0 0.0
    %421 = vmatpush2.msra.mxu0 0.0
    %422 = vmatprep.subr.mxu0 0.0
    %423 = vmatpush2.msra.mxu0 0.0
    %424 = vmatprep.subr.mxu0 0.0
    %425 = vmatpush2.msra.mxu0 0.0
    %426 = vmatprep.subr.mxu0 0.0
    %427 = vmatpush2.msra.mxu0 0.0
    %428 = vmatprep.subr.mxu0 0.0
    %429 = vmatpush2.msra.mxu0 0.0
    %430 = vmatprep.subr.mxu0 0.0
    %431 = vmatpush2.msra.mxu0 0.0
    %432 = vmatprep.subr.mxu0 0.0
    %433 = vmatpush2.msra.mxu0 0.0
    %434 = vmatprep.subr.mxu0 0.0
    %435 = vmatpush2.msra.mxu0 0.0
    %436 = vmatprep.subr.mxu0 0.0
    %437 = vmatpush2.msra.mxu0 0.0
    %438 = vmatprep.mubr.f32.mxu0 0.0
    %439 = vmatmul.mubr.f32.gmra.mxu0 %v348
    %v440 = vpop.f32.mrf.mxu0
    %v441 = vadd.f32 %v372, %v440
    %v442 = vpop.f32.mrf.mxu0
    %443 = vdwg.mxu0
    %444 = vst [vmem:[%s7] sm:$0xff] %v441
    // Predicated region
    $region42: #{mlp_forward.1} parent=1 // pred_check
      _
    $region43: #{mlp_forward.1} parent=1 // pred_check_branch
      %446 = sbr.rel (0) target = $region45
    $region44: #{mlp_forward.1} parent=1 // pred_region
      _
    $region45: #{mlp_forward.1} parent=1 // pred_fallthru
      _
    // Predicated region
    $region46: #{mlp_forward.1} parent=1 // pred_check
      _
    $region47: #{mlp_forward.1} parent=1 // pred_check_branch
      %448 = sbr.rel (0) target = $region49
    $region48: #{mlp_forward.1} parent=1 // pred_region
      _
    $region49: #{mlp_forward.1} parent=1 // pred_fallthru
      _
    %449 = vsyncpa [#allocation3], 1
    %450 = vsyncpa [#allocation5], 1

</llo_original>
